<compile_context>
chip_gen: v7x
topology: tpu7x:2x2x1
jax: 0.10.0
libtpu: 0.0.40
codegen_flags: <defaults>
</compile_context>

<pallas_src>
import functools

import jax
import jax.numpy as jnp
from jax.experimental import pallas as pl
from jax.experimental.pallas import tpu as pltpu


def actor_kernel(s_ref, w1_ref, b1_ref, w2_ref, b2_ref, w3_ref, b3_ref, out_ref):
    """Fused Actor forward: Linear->ReLU->Linear->ReLU->Linear->tanh->*100.

    s_ref:   (TB, in)      activation tile for this grid step
    w*_ref:  (in, out)     weights, resident across all grid steps
    b*_ref:  (1, out)      biases, broadcast over rows
    out_ref: (TB, out)
    """
    x = s_ref[...]
    h1 = jnp.dot(x, w1_ref[...], preferred_element_type=jnp.float32) + b1_ref[...]
    h1 = jnp.maximum(h1, 0.0)
    h2 = jnp.dot(h1, w2_ref[...], preferred_element_type=jnp.float32) + b2_ref[...]
    h2 = jnp.maximum(h2, 0.0)
    a = jnp.tanh(jnp.dot(h2, w3_ref[...], preferred_element_type=jnp.float32) + b3_ref[...])
    out_ref[...] = (a * 100.0).astype(out_ref.dtype)


def prepare_actor_params(torch_params):
    """One-time layout conversion (NOT in the per-call hot path).

    Input: PyTorch nn.Linear convention (w: [out, in], b: [out]).
    Output: kernel layout (w: [in, out], b: [1, out])."""
    return {
        "w1": jnp.asarray(torch_params["w1"]).T, "b1": jnp.asarray(torch_params["b1"])[None, :],
        "w2": jnp.asarray(torch_params["w2"]).T, "b2": jnp.asarray(torch_params["b2"])[None, :],
        "w3": jnp.asarray(torch_params["w3"]).T, "b3": jnp.asarray(torch_params["b3"])[None, :],
    }


@functools.partial(jax.jit, static_argnames=("batch_tile",))
def actor_forward(s, params, *, batch_tile: int = 512):
    """s: [B, input_size] f32; params: kernel-layout dict from prepare_actor_params."""
    w1, b1 = params["w1"], params["b1"]
    w2, b2 = params["w2"], params["b2"]
    w3, b3 = params["w3"], params["b3"]

    B = s.shape[0]
    in_size, hid = w1.shape
    out_size = w3.shape[1]

    # Batch tile: full array if small (block == array dims is always legal),
    # otherwise a multiple-of-8 streaming tile; weights stay VMEM-resident.
    tb = B if B <= batch_tile else batch_tile
    grid = (pl.cdiv(B, tb),)

    flops = 2 * B * (in_size * hid + hid * hid + hid * out_size)
    bytes_accessed = 4 * (
        B * in_size + B * out_size                       # activations in/out
        + in_size * hid + hid * hid + hid * out_size     # weights
        + 2 * hid + out_size                             # biases
    )
    cost = pl.CostEstimate(
        flops=flops, transcendentals=B * out_size, bytes_accessed=bytes_accessed
    )

    return pl.pallas_call(
        actor_kernel,
        out_shape=jax.ShapeDtypeStruct((B, out_size), jnp.float32),
        grid=grid,
        in_specs=[
            pl.BlockSpec((tb, in_size), lambda i: (i, 0)),        # s: streamed per batch tile
            pl.BlockSpec((in_size, hid), lambda i: (0, 0)),       # w1: resident
            pl.BlockSpec((1, hid), lambda i: (0, 0)),             # b1: resident
            pl.BlockSpec((hid, hid), lambda i: (0, 0)),           # w2: resident
            pl.BlockSpec((1, hid), lambda i: (0, 0)),             # b2: resident
            pl.BlockSpec((hid, out_size), lambda i: (0, 0)),      # w3: resident
            pl.BlockSpec((1, out_size), lambda i: (0, 0)),        # b3: resident
        ],
        out_specs=pl.BlockSpec((tb, out_size), lambda i: (i, 0)),
        compiler_params=pltpu.CompilerParams(
            dimension_semantics=("parallel",),                    # shard batch tiles across TCs (v7x)
        ),
        cost_estimate=cost,
    )(s, w1, b1, w2, b2, w3, b3)
    # TODO(synk): for very large batches with out_size=8 the output store is
    # lane-sparse (vst.msk); a lane-dense repack only pays off once stores
    # dominate, so it is intentionally not done here.


def init_actor_params(key, input_size, hidden_size, output_size):
    """Deterministic init mimicking PyTorch nn.Linear default (U[-1/sqrt(fan_in), +])."""
    ks = jax.random.split(key, 6)

    def lin(kw, kb, fan_in, fan_out):
        bound = 1.0 / jnp.sqrt(fan_in)
        w = jax.random.uniform(kw, (fan_out, fan_in), jnp.float32, -bound, bound)
        b = jax.random.uniform(kb, (fan_out,), jnp.float32, -bound, bound)
        return w, b

    w1, b1 = lin(ks[0], ks[1], input_size, hidden_size)
    w2, b2 = lin(ks[2], ks[3], hidden_size, hidden_size)
    w3, b3 = lin(ks[4], ks[5], hidden_size, output_size)
    return {"w1": w1, "b1": b1, "w2": w2, "b2": b2, "w3": w3, "b3": b3}


def actor_forward_ref(s, p):
    """Pure-JAX reference matching the PyTorch module exactly (PyTorch layout)."""
    x = jnp.maximum(s @ p["w1"].T + p["b1"], 0.0)
    x = jnp.maximum(x @ p["w2"].T + p["b2"], 0.0)
    x = jnp.tanh(x @ p["w3"].T + p["b3"])
    return x * 100.0


if __name__ == "__main__":
    key = jax.random.PRNGKey(0)
    k_param, k_in, k_big = jax.random.split(key, 3)

    batch, input_size, hidden_size, output_size = 4, 16, 32, 8
    torch_params = init_actor_params(k_param, input_size, hidden_size, output_size)
    params = prepare_actor_params(torch_params)   # one-time layout conversion

    # Small-batch path (single grid step, block == full array).
    s = jax.random.normal(k_in, (batch, input_size), jnp.float32)
    out = jax.block_until_ready(actor_forward(s, params))
    ref = actor_forward_ref(s, torch_params)
    assert out.shape == (batch, output_size)
    assert jnp.allclose(out, ref, atol=1e-4, rtol=1e-4), "small-batch mismatch vs reference"

    # Large-batch path: gridded batch axis with resident weights (2 tiles of 128).
    s_big = jax.random.normal(k_big, (256, input_size), jnp.float32)
    out_big = jax.block_until_ready(actor_forward(s_big, params, batch_tile=128))
    ref_big = actor_forward_ref(s_big, torch_params)
    assert out_big.shape == (256, output_size)
    assert jnp.allclose(out_big, ref_big, atol=1e-4, rtol=1e-4), "batched mismatch vs reference"

    print("KERNEL_OK")
</pallas_src>

<mosaic_0001>
module attributes {stable_mosaic.version = 11 : i64} {
  func.func @actor_kernel(%arg0: i32, %arg1: memref<4x16xf32, #tpu.memory_space<vmem>>, %arg2: memref<16x32xf32, #tpu.memory_space<vmem>>, %arg3: memref<1x32xf32, #tpu.memory_space<vmem>>, %arg4: memref<32x32xf32, #tpu.memory_space<vmem>>, %arg5: memref<1x32xf32, #tpu.memory_space<vmem>>, %arg6: memref<32x8xf32, #tpu.memory_space<vmem>>, %arg7: memref<1x8xf32, #tpu.memory_space<vmem>>, %arg8: memref<4x8xf32, #tpu.memory_space<vmem>>) attributes {dimension_semantics = [#tpu.dimension_semantics<parallel>], iteration_bounds = array<i64: 1>, scalar_prefetch = 0 : i64, scratch_operands = 0 : i64, tpu.core_type = #tpu.core_type<tc>, window_params = [{transform_indices = @transform_0, window_bounds = array<i64: 4, 16>}, {pipeline_mode = #tpu.pipeline_mode<synchronous>, transform_indices = @transform_1, window_bounds = array<i64: 16, 32>}, {pipeline_mode = #tpu.pipeline_mode<synchronous>, transform_indices = @transform_2, window_bounds = array<i64: 1, 32>}, {pipeline_mode = #tpu.pipeline_mode<synchronous>, transform_indices = @transform_3, window_bounds = array<i64: 32, 32>}, {pipeline_mode = #tpu.pipeline_mode<synchronous>, transform_indices = @transform_4, window_bounds = array<i64: 1, 32>}, {pipeline_mode = #tpu.pipeline_mode<synchronous>, transform_indices = @transform_5, window_bounds = array<i64: 32, 8>}, {pipeline_mode = #tpu.pipeline_mode<synchronous>, transform_indices = @transform_6, window_bounds = array<i64: 1, 8>}, {transform_indices = @transform_7, window_bounds = array<i64: 4, 8>}]} {
    %c0 = arith.constant 0 : index
    %c0_0 = arith.constant 0 : index
    %0 = vector.load %arg1[%c0, %c0_0] : memref<4x16xf32, #tpu.memory_space<vmem>>, vector<4x16xf32>
    %c0_1 = arith.constant 0 : index
    %c0_2 = arith.constant 0 : index
    %1 = vector.load %arg2[%c0_1, %c0_2] : memref<16x32xf32, #tpu.memory_space<vmem>>, vector<16x32xf32>
    %cst = arith.constant dense<0.000000e+00> : vector<4x32xf32>
    %2 = tpu.matmul %0, %1, %cst {dimension_numbers = #tpu.dot_dimension_numbers<[1], [0], [0], [1], [0, 0, 1, 1], [], []>} : vector<4x16xf32>, vector<16x32xf32>, vector<4x32xf32> -> vector<4x32xf32>
    %c0_3 = arith.constant 0 : index
    %c0_4 = arith.constant 0 : index
    %3 = vector.load %arg3[%c0_3, %c0_4] : memref<1x32xf32, #tpu.memory_space<vmem>>, vector<1x32xf32>
    %4 = vector.broadcast %3 : vector<1x32xf32> to vector<4x32xf32>
    %5 = arith.addf %2, %4 : vector<4x32xf32>
    %cst_5 = arith.constant 0.000000e+00 : f32
    %6 = vector.broadcast %cst_5 : f32 to vector<4x32xf32>
    %7 = arith.maximumf %5, %6 : vector<4x32xf32>
    %c0_6 = arith.constant 0 : index
    %c0_7 = arith.constant 0 : index
    %8 = vector.load %arg4[%c0_6, %c0_7] : memref<32x32xf32, #tpu.memory_space<vmem>>, vector<32x32xf32>
    %cst_8 = arith.constant dense<0.000000e+00> : vector<4x32xf32>
    %9 = tpu.matmul %7, %8, %cst_8 {dimension_numbers = #tpu.dot_dimension_numbers<[1], [0], [0], [1], [0, 0, 1, 1], [], []>} : vector<4x32xf32>, vector<32x32xf32>, vector<4x32xf32> -> vector<4x32xf32>
    %c0_9 = arith.constant 0 : index
    %c0_10 = arith.constant 0 : index
    %10 = vector.load %arg5[%c0_9, %c0_10] : memref<1x32xf32, #tpu.memory_space<vmem>>, vector<1x32xf32>
    %11 = vector.broadcast %10 : vector<1x32xf32> to vector<4x32xf32>
    %12 = arith.addf %9, %11 : vector<4x32xf32>
    %cst_11 = arith.constant 0.000000e+00 : f32
    %13 = vector.broadcast %cst_11 : f32 to vector<4x32xf32>
    %14 = arith.maximumf %12, %13 : vector<4x32xf32>
    %c0_12 = arith.constant 0 : index
    %c0_13 = arith.constant 0 : index
    %15 = vector.load %arg6[%c0_12, %c0_13] : memref<32x8xf32, #tpu.memory_space<vmem>>, vector<32x8xf32>
    %cst_14 = arith.constant dense<0.000000e+00> : vector<4x8xf32>
    %16 = tpu.matmul %14, %15, %cst_14 {dimension_numbers = #tpu.dot_dimension_numbers<[1], [0], [0], [1], [0, 0, 1, 1], [], []>} : vector<4x32xf32>, vector<32x8xf32>, vector<4x8xf32> -> vector<4x8xf32>
    %c0_15 = arith.constant 0 : index
    %c0_16 = arith.constant 0 : index
    %17 = vector.load %arg7[%c0_15, %c0_16] : memref<1x8xf32, #tpu.memory_space<vmem>>, vector<1x8xf32>
    %18 = vector.broadcast %17 : vector<1x8xf32> to vector<4x8xf32>
    %19 = arith.addf %16, %18 : vector<4x8xf32>
    %20 = math.tanh %19 : vector<4x8xf32>
    %cst_17 = arith.constant 1.000000e+02 : f32
    %21 = vector.broadcast %cst_17 : f32 to vector<4x8xf32>
    %22 = arith.mulf %20, %21 : vector<4x8xf32>
    %c0_18 = arith.constant 0 : index
    %c0_19 = arith.constant 0 : index
    %23 = vector.load %arg8[%c0_18, %c0_19] : memref<4x8xf32, #tpu.memory_space<vmem>>, vector<4x8xf32>
    tpu.vector_store %arg8[%c0_18, %c0_19], %22 {strides = array<i32>} : memref<4x8xf32, #tpu.memory_space<vmem>>, vector<4x8xf32>,
    return
  }
  func.func @transform_0(%arg0: i32) -> (i32, i32) {
    %c0_i32 = arith.constant 0 : i32
    %c0_i32_0 = arith.constant 0 : i32
    return %arg0, %c0_i32 : i32, i32
  }
  func.func @transform_1(%arg0: i32) -> (i32, i32) {
    %c0_i32 = arith.constant 0 : i32
    %c0_i32_0 = arith.constant 0 : i32
    %c0_i32_1 = arith.constant 0 : i32
    return %c0_i32, %c0_i32_0 : i32, i32
  }
  func.func @transform_2(%arg0: i32) -> (i32, i32) {
    %c0_i32 = arith.constant 0 : i32
    %c0_i32_0 = arith.constant 0 : i32
    %c0_i32_1 = arith.constant 0 : i32
    return %c0_i32, %c0_i32_0 : i32, i32
  }
  func.func @transform_3(%arg0: i32) -> (i32, i32) {
    %c0_i32 = arith.constant 0 : i32
    %c0_i32_0 = arith.constant 0 : i32
    %c0_i32_1 = arith.constant 0 : i32
    return %c0_i32, %c0_i32_0 : i32, i32
  }
  func.func @transform_4(%arg0: i32) -> (i32, i32) {
    %c0_i32 = arith.constant 0 : i32
    %c0_i32_0 = arith.constant 0 : i32
    %c0_i32_1 = arith.constant 0 : i32
    return %c0_i32, %c0_i32_0 : i32, i32
  }
  func.func @transform_5(%arg0: i32) -> (i32, i32) {
    %c0_i32 = arith.constant 0 : i32
    %c0_i32_0 = arith.constant 0 : i32
    %c0_i32_1 = arith.constant 0 : i32
    return %c0_i32, %c0_i32_0 : i32, i32
  }
  func.func @transform_6(%arg0: i32) -> (i32, i32) {
    %c0_i32 = arith.constant 0 : i32
    %c0_i32_0 = arith.constant 0 : i32
    %c0_i32_1 = arith.constant 0 : i32
    return %c0_i32, %c0_i32_0 : i32, i32
  }
  func.func @transform_7(%arg0: i32) -> (i32, i32) {
    %c0_i32 = arith.constant 0 : i32
    %c0_i32_0 = arith.constant 0 : i32
    return %arg0, %c0_i32 : i32, i32
  }
}

</mosaic_0001>

<llo_original>
// kernel: actor_forward.1
$region0: #{actor_forward.1}
  #allocation0 [shape = 'u32[]', space=smem, size = 0x4, offset = 0x4, fixed_abs, tag = 'smem constant byte address 0x4 - core index']
  #allocation1 [shape = 'u32[144,128]{1,0:T(1,128)}', space=vmem, size = 0x12000, scoped, tag = 'internal scratch']
  %s0 = inlined_call_operand.vmem [shape: f32[4,16], index: 0, kind: input, shape index: {}]
  %s1 = inlined_call_operand.vmem [shape: f32[16,32], index: 1, kind: input, shape index: {}]
  %s2 = inlined_call_operand.vmem [shape: f32[1,32], index: 2, kind: input, shape index: {}]
  %s3 = inlined_call_operand.vmem [shape: f32[32,32], index: 3, kind: input, shape index: {}]
  %s4 = inlined_call_operand.vmem [shape: f32[1,32], index: 4, kind: input, shape index: {}]
  %s5 = inlined_call_operand.vmem [shape: f32[32,8], index: 5, kind: input, shape index: {}]
  %s6 = inlined_call_operand.hbm [shape: f32[1,8], index: 6, kind: input, shape index: {}]
  %s7 = inlined_call_operand.hbm [shape: f32[4,8], index: 7, kind: output, shape index: {}]
  %s8 = sld [smem:[#allocation0]]
  $region42: #{actor_forward.1} parent=0
    _
  %s10 = ssub.s32 1, %s8
  %s11 = scalar_select 0, %s10, %s8
  $region1: #{actor_forward.1} parent=0
    #allocation2 [shape = 'u8[512]{0}', space=vmem, size = 0x400, scoped, tag = 'input window, operand 6, single buffered']
    #allocation3 [shape = 's32[1]{0}', space=sflag, size = 0x4, scoped, tag = 'scoped memory for actor_forward.1']
    #allocation4 [shape = 's32[1]{0}', space=sflag, size = 0x4, scoped, tag = 'scoped memory for actor_forward.1']
    #allocation5 [shape = 'u8[2048]{0}', space=vmem, size = 0x800, scoped, tag = 'output window, operand 0, single buffered']
    %12 = vsyncpa [#allocation3], 0
    %13 = vsyncpa [#allocation4], 0
    // Predicated region
    $region2: #{actor_forward.1} parent=1 // pred_check
      _
    $region3: #{actor_forward.1} parent=1 // pred_check_branch
      %15 = sbr.rel (0) target = $region5
    $region4: #{actor_forward.1} parent=1 // pred_region
      _
    $region5: #{actor_forward.1} parent=1 // pred_fallthru
      _
    // Predicated region
    $region6: #{actor_forward.1} parent=1 // pred_check
      _
    $region7: #{actor_forward.1} parent=1 // pred_check_branch
      %17 = sbr.rel (0) target = $region9
    $region8: #{actor_forward.1} parent=1 // pred_region
      _
    $region9: #{actor_forward.1} parent=1 // pred_fallthru
      _
    // Predicated region
    $region10: #{actor_forward.1} parent=1 // pred_check
      _
    $region11: #{actor_forward.1} parent=1 // pred_check_branch
      %19 = sbr.rel (0) target = $region13
    $region12: #{actor_forward.1} parent=1 // pred_region
      _
    $region13: #{actor_forward.1} parent=1 // pred_fallthru
      _
    // Predicated region
    $region14: #{actor_forward.1} parent=1 // pred_check
      _
    $region15: #{actor_forward.1} parent=1 // pred_check_branch
      %21 = sbr.rel (0) target = $region17
    $region16: #{actor_forward.1} parent=1 // pred_region
      _
    $region17: #{actor_forward.1} parent=1 // pred_fallthru
      _
    // Predicated region
    $region18: #{actor_forward.1} parent=1 // pred_check
      _
    $region19: #{actor_forward.1} parent=1 // pred_check_branch
      %23 = sbr.rel (0) target = $region21
    $region20: #{actor_forward.1} parent=1 // pred_region
      _
    $region21: #{actor_forward.1} parent=1 // pred_fallthru
      _
    // Predicated region
    $region22: #{actor_forward.1} parent=1 // pred_check
      _
    $region23: #{actor_forward.1} parent=1 // pred_check_branch
      %25 = sbr.rel (0) target = $region25
    $region24: #{actor_forward.1} parent=1 // pred_region
      _
    $region25: #{actor_forward.1} parent=1 // pred_fallthru
      _
    // Predicated region
    $region26: #{actor_forward.1} parent=1 // pred_check
      _
    $region27: #{actor_forward.1} parent=1 // pred_check_branch
      %27 = sbr.rel (0) target = $region29
    $region28: #{actor_forward.1} parent=1 // pred_region
      %s29 = ssub.s32 16, 16
      %30 = vsyncadd [#allocation3], %s29
      %s32 = sshll.u32 [#allocation2], 4
      %s33 = int_to_ptr.vmem [resolvable:$true] %s32
      %35 = dma.hbm_to_vmem [thread:$0]  %s6, 16, %s33, [#allocation3]
    $region29: #{actor_forward.1} parent=1 // pred_fallthru
      _
    // Predicated region
    $region30: #{actor_forward.1} parent=1 // pred_check
      _
    $region31: #{actor_forward.1} parent=1 // pred_check_branch
      %37 = sbr.rel (0) target = $region33
    $region32: #{actor_forward.1} parent=1 // pred_region
      %38 = dma.done [#allocation3], 16
    $region33: #{actor_forward.1} parent=1 // pred_fallthru
      _
    %v39 = vld [vmem:[%s0] sm:$0xf]
    %v40 = vld [vmem:[%s1] sm:$0xff]
    %v41 = vld [vmem:[%s1 + $0x8] sm:$0xff]
    %v42 = vld [vmem:[%s2] sm:$0x1]
    %v44 = vlaneseq
    %v45 = vshrl.u32 %v44, 7
    %v46 = vsub.s32 0, %v45
    %v47 = vrot.slane %v42, %v46
    %vm49 = vcmask 130048
    %v51 = vsel %vm49, %v39, 0
    %53 = vmatprep.subr.mxu0 0.0
    %54 = vmatpush1.msra.mxu0 %v40
    %55 = vmatprep.subr.mxu0 0.0
    %56 = vmatpush1.msra.mxu0 %v41
    %57 = vmatprep.subr.mxu0 0.0
    %58 = vmatpush1.msra.mxu0 0.0
    %59 = vmatprep.subr.mxu0 0.0
    %60 = vmatpush1.msra.mxu0 0.0
    %61 = vmatprep.subr.mxu0 0.0
    %62 = vmatpush1.msra.mxu0 0.0
    %63 = vmatprep.subr.mxu0 0.0
    %64 = vmatpush1.msra.mxu0 0.0
    %65 = vmatprep.subr.mxu0 0.0
    %66 = vmatpush1.msra.mxu0 0.0
    %67 = vmatprep.subr.mxu0 0.0
    %68 = vmatpush1.msra.mxu0 0.0
    %69 = vmatprep.subr.mxu0 0.0
    %70 = vmatpush1.msra.mxu0 0.0
    %71 = vmatprep.subr.mxu0 0.0
    %72 = vmatpush1.msra.mxu0 0.0
    %73 = vmatprep.subr.mxu0 0.0
    %74 = vmatpush1.msra.mxu0 0.0
    %75 = vmatprep.subr.mxu0 0.0
    %76 = vmatpush1.msra.mxu0 0.0
    %77 = vmatprep.subr.mxu0 0.0
    %78 = vmatpush1.msra.mxu0 0.0
    %79 = vmatprep.subr.mxu0 0.0
    %80 = vmatpush1.msra.mxu0 0.0
    %81 = vmatprep.subr.mxu0 0.0
    %82 = vmatpush1.msra.mxu0 0.0
    %83 = vmatprep.subr.mxu0 0.0
    %84 = vmatpush1.msra.mxu0 0.0
    %85 = vmatprep.subr.mxu0 0.0
    %86 = vmatpush1.msra.mxu0 0.0
    %87 = vmatprep.subr.mxu0 0.0
    %88 = vmatpush1.msra.mxu0 0.0
    %89 = vmatprep.subr.mxu0 0.0
    %90 = vmatpush1.msra.mxu0 0.0
    %91 = vmatprep.subr.mxu0 0.0
    %92 = vmatpush1.msra.mxu0 0.0
    %93 = vmatprep.subr.mxu0 0.0
    %94 = vmatpush1.msra.mxu0 0.0
    %95 = vmatprep.subr.mxu0 0.0
    %96 = vmatpush1.msra.mxu0 0.0
    %97 = vmatprep.subr.mxu0 0.0
    %98 = vmatpush1.msra.mxu0 0.0
    %99 = vmatprep.subr.mxu0 0.0
    %100 = vmatpush1.msra.mxu0 0.0
    %101 = vmatprep.subr.mxu0 0.0
    %102 = vmatpush1.msra.mxu0 0.0
    %103 = vmatprep.subr.mxu0 0.0
    %104 = vmatpush1.msra.mxu0 0.0
    %105 = vmatprep.subr.mxu0 0.0
    %106 = vmatpush1.msra.mxu0 0.0
    %107 = vmatprep.subr.mxu0 0.0
    %108 = vmatpush1.msra.mxu0 0.0
    %109 = vmatprep.subr.mxu0 0.0
    %110 = vmatpush1.msra.mxu0 0.0
    %111 = vmatprep.subr.mxu0 0.0
    %112 = vmatpush1.msra.mxu0 0.0
    %113 = vmatprep.subr.mxu0 0.0
    %114 = vmatpush1.msra.mxu0 0.0
    %115 = vmatprep.subr.mxu0 0.0
    %116 = vmatpush1.msra.mxu0 0.0
    %117 = vmatprep.mubr.f32.mxu0 0.0
    %118 = vmatmul.mubr.f32.gmra.mrb[0].mxu0 %v51
    %v119 = vpop.f32.mrb[0].mxu0
    %v120 = vadd.f32 %v47, %v119
    %v121 = vpop.f32.mrb[0].mxu0
    %122 = vdwg.mxu0
    %v123 = vmax.f32 %v120, 0.0
    %v124 = vld [vmem:[%s3] sm:$0xff]
    %v125 = vld [vmem:[%s3 + $0x8] sm:$0xff]
    %v126 = vld [vmem:[%s3 + $0x10] sm:$0xff]
    %v127 = vld [vmem:[%s3 + $0x18] sm:$0xff]
    %v128 = vld [vmem:[%s4] sm:$0x1]
    %v130 = vlaneseq
    %v131 = vshrl.u32 %v130, 7
    %v132 = vsub.s32 0, %v131
    %v133 = vrot.slane %v128, %v132
    %vm135 = vcmask 261120
    %v137 = vsel %vm135, %v123, 0
    %139 = vmatprep.subr.mxu0 0.0
    %140 = vmatpush1.msra.mxu0 %v124
    %141 = vmatprep.subr.mxu0 0.0
    %142 = vmatpush1.msra.mxu0 %v125
    %143 = vmatprep.subr.mxu0 0.0
    %144 = vmatpush1.msra.mxu0 %v126
    %145 = vmatprep.subr.mxu0 0.0
    %146 = vmatpush1.msra.mxu0 %v127
    %147 = vmatprep.subr.mxu0 0.0
    %148 = vmatpush1.msra.mxu0 0.0
    %149 = vmatprep.subr.mxu0 0.0
    %150 = vmatpush1.msra.mxu0 0.0
    %151 = vmatprep.subr.mxu0 0.0
    %152 = vmatpush1.msra.mxu0 0.0
    %153 = vmatprep.subr.mxu0 0.0
    %154 = vmatpush1.msra.mxu0 0.0
    %155 = vmatprep.subr.mxu0 0.0
    %156 = vmatpush1.msra.mxu0 0.0
    %157 = vmatprep.subr.mxu0 0.0
    %158 = vmatpush1.msra.mxu0 0.0
    %159 = vmatprep.subr.mxu0 0.0
    %160 = vmatpush1.msra.mxu0 0.0
    %161 = vmatprep.subr.mxu0 0.0
    %162 = vmatpush1.msra.mxu0 0.0
    %163 = vmatprep.subr.mxu0 0.0
    %164 = vmatpush1.msra.mxu0 0.0
    %165 = vmatprep.subr.mxu0 0.0
    %166 = vmatpush1.msra.mxu0 0.0
    %167 = vmatprep.subr.mxu0 0.0
    %168 = vmatpush1.msra.mxu0 0.0
    %169 = vmatprep.subr.mxu0 0.0
    %170 = vmatpush1.msra.mxu0 0.0
    %171 = vmatprep.subr.mxu0 0.0
    %172 = vmatpush1.msra.mxu0 0.0
    %173 = vmatprep.subr.mxu0 0.0
    %174 = vmatpush1.msra.mxu0 0.0
    %175 = vmatprep.subr.mxu0 0.0
    %176 = vmatpush1.msra.mxu0 0.0
    %177 = vmatprep.subr.mxu0 0.0
    %178 = vmatpush1.msra.mxu0 0.0
    %179 = vmatprep.subr.mxu0 0.0
    %180 = vmatpush1.msra.mxu0 0.0
    %181 = vmatprep.subr.mxu0 0.0
    %182 = vmatpush1.msra.mxu0 0.0
    %183 = vmatprep.subr.mxu0 0.0
    %184 = vmatpush1.msra.mxu0 0.0
    %185 = vmatprep.subr.mxu0 0.0
    %186 = vmatpush1.msra.mxu0 0.0
    %187 = vmatprep.subr.mxu0 0.0
    %188 = vmatpush1.msra.mxu0 0.0
    %189 = vmatprep.subr.mxu0 0.0
    %190 = vmatpush1.msra.mxu0 0.0
    %191 = vmatprep.subr.mxu0 0.0
    %192 = vmatpush1.msra.mxu0 0.0
    %193 = vmatprep.subr.mxu0 0.0
    %194 = vmatpush1.msra.mxu0 0.0
    %195 = vmatprep.subr.mxu0 0.0
    %196 = vmatpush1.msra.mxu0 0.0
    %197 = vmatprep.subr.mxu0 0.0
    %198 = vmatpush1.msra.mxu0 0.0
    %199 = vmatprep.subr.mxu0 0.0
    %200 = vmatpush1.msra.mxu0 0.0
    %201 = vmatprep.subr.mxu0 0.0
    %202 = vmatpush1.msra.mxu0 0.0
    %203 = vmatprep.mubr.f32.mxu0 0.0
    %204 = vmatmul.mubr.f32.gmra.mrb[0].mxu0 %v137
    %v205 = vpop.f32.mrb[0].mxu0
    %v206 = vadd.f32 %v133, %v205
    %v207 = vpop.f32.mrb[0].mxu0
    %208 = vdwg.mxu0
    %v209 = vmax.f32 %v206, 0.0
    %v210 = vld [vmem:[%s5] sm:$0xff]
    %v211 = vld [vmem:[%s5 + $0x8] sm:$0xff]
    %v212 = vld [vmem:[%s5 + $0x10] sm:$0xff]
    %v213 = vld [vmem:[%s5 + $0x18] sm:$0xff]
    %v214 = vld [vmem:[#allocation2] sm:$0x1]
    %v216 = vlaneseq
    %v217 = vshrl.u32 %v216, 7
    %v218 = vsub.s32 0, %v217
    %v219 = vrot.slane %v214, %v218
    %v222 = vsel %vm135, %v209, 0
    %224 = vmatprep.subr.mxu0 0.0
    %225 = vmatpush1.msra.mxu0 %v210
    %226 = vmatprep.subr.mxu0 0.0
    %227 = vmatpush1.msra.mxu0 %v211
    %228 = vmatprep.subr.mxu0 0.0
    %229 = vmatpush1.msra.mxu0 %v212
    %230 = vmatprep.subr.mxu0 0.0
    %231 = vmatpush1.msra.mxu0 %v213
    %232 = vmatprep.subr.mxu0 0.0
    %233 = vmatpush1.msra.mxu0 0.0
    %234 = vmatprep.subr.mxu0 0.0
    %235 = vmatpush1.msra.mxu0 0.0
    %236 = vmatprep.subr.mxu0 0.0
    %237 = vmatpush1.msra.mxu0 0.0
    %238 = vmatprep.subr.mxu0 0.0
    %239 = vmatpush1.msra.mxu0 0.0
    %240 = vmatprep.subr.mxu0 0.0
    %241 = vmatpush1.msra.mxu0 0.0
    %242 = vmatprep.subr.mxu0 0.0
    %243 = vmatpush1.msra.mxu0 0.0
    %244 = vmatprep.subr.mxu0 0.0
    %245 = vmatpush1.msra.mxu0 0.0
    %246 = vmatprep.subr.mxu0 0.0
    %247 = vmatpush1.msra.mxu0 0.0
    %248 = vmatprep.subr.mxu0 0.0
    %249 = vmatpush1.msra.mxu0 0.0
    %250 = vmatprep.subr.mxu0 0.0
    %251 = vmatpush1.msra.mxu0 0.0
    %252 = vmatprep.subr.mxu0 0.0
    %253 = vmatpush1.msra.mxu0 0.0
    %254 = vmatprep.subr.mxu0 0.0
    %255 = vmatpush1.msra.mxu0 0.0
    %256 = vmatprep.subr.mxu0 0.0
    %257 = vmatpush1.msra.mxu0 0.0
    %258 = vmatprep.subr.mxu0 0.0
    %259 = vmatpush1.msra.mxu0 0.0
    %260 = vmatprep.subr.mxu0 0.0
    %261 = vmatpush1.msra.mxu0 0.0
    %262 = vmatprep.subr.mxu0 0.0
    %263 = vmatpush1.msra.mxu0 0.0
    %264 = vmatprep.subr.mxu0 0.0
    %265 = vmatpush1.msra.mxu0 0.0
    %266 = vmatprep.subr.mxu0 0.0
    %267 = vmatpush1.msra.mxu0 0.0
    %268 = vmatprep.subr.mxu0 0.0
    %269 = vmatpush1.msra.mxu0 0.0
    %270 = vmatprep.subr.mxu0 0.0
    %271 = vmatpush1.msra.mxu0 0.0
    %272 = vmatprep.subr.mxu0 0.0
    %273 = vmatpush1.msra.mxu0 0.0
    %274 = vmatprep.subr.mxu0 0.0
    %275 = vmatpush1.msra.mxu0 0.0
    %276 = vmatprep.subr.mxu0 0.0
    %277 = vmatpush1.msra.mxu0 0.0
    %278 = vmatprep.subr.mxu0 0.0
    %279 = vmatpush1.msra.mxu0 0.0
    %280 = vmatprep.subr.mxu0 0.0
    %281 = vmatpush1.msra.mxu0 0.0
    %282 = vmatprep.subr.mxu0 0.0
    %283 = vmatpush1.msra.mxu0 0.0
    %284 = vmatprep.subr.mxu0 0.0
    %285 = vmatpush1.msra.mxu0 0.0
    %286 = vmatprep.subr.mxu0 0.0
    %287 = vmatpush1.msra.mxu0 0.0
    %288 = vmatprep.mubr.f32.mxu0 0.0
    %289 = vmatmul.mubr.f32.gmra.mrb[0].mxu0 %v222
    %v290 = vpop.f32.mrb[0].mxu0
    %v291 = vadd.f32 %v219, %v290
    %v292 = vpop.f32.mrb[0].mxu0
    %293 = vdwg.mxu0
    %v294 = vtanh.pop %v291
    %v295 = vmul.f32 %v294, 100.0
    %vm296 = vcmask 60416
    %297 = vst.msk [vmem:[#allocation5] sm:$0xf] %vm296, %v295
    // Predicated region
    $region34: #{actor_forward.1} parent=1 // pred_check
      _
    $region35: #{actor_forward.1} parent=1 // pred_check_branch
      %299 = sbr.rel (0) target = $region37
    $region36: #{actor_forward.1} parent=1 // pred_region
      %s301 = ssub.s32 64, 64
      %302 = vsyncadd [#allocation4], %s301
      %s304 = sshll.u32 [#allocation5], 4
      %s305 = int_to_ptr.vmem [resolvable:$true] %s304
      %307 = dma.vmem_to_hbm [thread:$0]  %s305, 64, %s7, [#allocation4]
    $region37: #{actor_forward.1} parent=1 // pred_fallthru
      _
    // Predicated region
    $region38: #{actor_forward.1} parent=1 // pred_check
      _
    $region39: #{actor_forward.1} parent=1 // pred_check_branch
      %309 = sbr.rel (0) target = $region41
    $region40: #{actor_forward.1} parent=1 // pred_region
      %310 = dma.done [#allocation4], 64
    $region41: #{actor_forward.1} parent=1 // pred_fallthru
      _
    %311 = vsyncpa [#allocation3], 1
    %312 = vsyncpa [#allocation4], 1

</llo_original>
